<compile_context>
chip_gen: v7x
topology: tpu7x:2x2x1
jax: 0.10.0
libtpu: 0.0.40
codegen_flags: <defaults>
</compile_context>

<pallas_src>
import functools

import jax
import jax.numpy as jnp
from jax import lax
from jax.experimental import pallas as pl
from jax.experimental.pallas import tpu as pltpu


def _round_up(x, m):
    return ((x + m - 1) // m) * m


def _device_tuning():
    """(elementwise dtype, scoped-VMEM limit bytes, is_v7x) from TPU kind."""
    try:
        kind = jax.devices()[0].device_kind.lower()
    except Exception:
        kind = ""
    is_v7 = ("v7" in kind) or ("7x" in kind)
    is_v6 = "v6" in kind
    # bf16 VPU/EUP only exists on v6e/v7x; v5e and older would insert converts.
    ew_dtype = jnp.bfloat16 if (is_v6 or is_v7) else jnp.float32
    if is_v7:                      # 64 MiB physical VMEM -> stay well below
        vmem_limit = 48 * 1024 * 1024
    elif is_v6 or "v5" in kind:    # 128 MiB physical VMEM
        vmem_limit = 64 * 1024 * 1024
    else:                          # unknown generation -> conservative default
        vmem_limit = 32 * 1024 * 1024
    return ew_dtype, vmem_limit, is_v7


def _fold_to_8x128(x):
    """Sum a (tg, ta) tile down to one (8, 128) f32 tile.

    Aligned static slices + elementwise adds only (pure VALU vreg adds, no
    cross-lane XLU reduce, no layout-changing reshape); accumulation in f32.
    """
    tg, ta = x.shape
    acc = x[0:8, :].astype(jnp.float32)
    for i in range(1, tg // 8):
        acc = acc + x[i * 8:(i + 1) * 8, :].astype(jnp.float32)
    out = acc[:, 0:128]
    for j in range(1, ta // 128):
        out = out + acc[:, j * 128:(j + 1) * 128]
    return out


def _contrastive_cosine_kernel(g_ref, a_ref, flags_ref, out_ref, *, m, ew_dtype):
    j = pl.program_id(1)  # A (reduction) axis, innermost / "arbitrary"

    @pl.when(j == 0)
    def _():
        out_ref[...] = jnp.zeros_like(out_ref)

    # sim = embed_g @ embed_a.T over the (padded) feature dim: bf16 in, f32 acc.
    sim = lax.dot_general(
        g_ref[...], a_ref[...],
        dimension_numbers=(((1,), (1,)), ((), ())),
        preferred_element_type=jnp.float32,
    )                                                        # (tg, ta) f32

    # Cancellation-sensitive 1 - sim stays f32; clamp protects sqrt from
    # rounding past 1.0.  sqrt / hinge / selects run in ew_dtype (bf16 on
    # v6e/v7x -> half the EUP/VALU work; f32 on v5e).
    d2 = jnp.maximum(2.0 * (1.0 - sim), 0.0).astype(ew_dtype)
    dist = jnp.sqrt(d2)

    flags = flags_ref[...]                                   # int8: bit0=pos, bit1=neg
    pos = (flags & 1) != 0
    neg = (flags & 2) != 0

    pos_c = jnp.where(pos, dist, 0.0)                        # masked distances
    neg_c = jnp.where(neg, jnp.maximum(m - dist, 0.0), 0.0)  # masked hinge

    # Resident (1, 16, 128) f32 output block: sublanes 0..7 hold the positive
    # partial sums, sublanes 8..15 the negative ones (lane-dense stores).
    out_ref[0, 0:8, :] += _fold_to_8x128(pos_c)
    out_ref[0, 8:16, :] += _fold_to_8x128(neg_c)


def contrastive_cosine_loss(embed_g, embed_a, pos, neg, m=0.5, *,
                            tg=256, ta=1024, compute_dtype=jnp.bfloat16,
                            elementwise_dtype=None, vmem_limit_bytes=None):
    """JAX/Pallas equivalent of ContrastiveCosineLoss.forward.

    embed_g: (G, D), embed_a: (A, D); pos / neg: boolean masks with G*A
    elements (any shape; flattened, matching the PyTorch flatten semantics).
    Returns a scalar float32 loss.
    """
    G, D = embed_g.shape
    A, Da = embed_a.shape
    assert D == Da, "feature dims must match"

    ew_auto, vmem_auto, is_v7 = _device_tuning()
    ew_dtype = ew_auto if elementwise_dtype is None else elementwise_dtype
    vmem_limit = vmem_auto if vmem_limit_bytes is None else vmem_limit_bytes

    Dp = _round_up(D, 128)             # MXU-friendly contraction length

    # Tile sizes: lane/sublane friendly, shrunk for small inputs.
    tg = min(tg, _round_up(G, 32))     # sublane axis (int8 flags -> x32)
    ta = min(ta, _round_up(A, 128))    # lane axis (x128)

    # Keep double-buffered streams + f32 intermediates inside the VMEM budget
    # (matters on v7x where physical VMEM is only 64 MiB) by shrinking ta
    # first, then tg, when D is large.
    def _est(tg_, ta_):
        stream = 2 * (tg_ * Dp * 2 + ta_ * Dp * 2 + tg_ * ta_)  # dbl-buffered in
        interm = 4 * tg_ * ta_ * 4                              # sim/dist/masked
        return stream + interm + 16 * 128 * 4
    budget = int(vmem_limit * 0.75)
    while _est(tg, ta) > budget and ta > 128:
        ta //= 2
    while _est(tg, ta) > budget and tg > 32:
        tg = max(32, tg // 2)

    # v7x has 2 TensorCores: make sure the "parallel" G axis has >= 2 blocks.
    if is_v7 and _round_up(G, tg) == tg and G > 32:
        tg = _round_up(-(-G // 2), 32)

    g_pad = _round_up(G, tg)
    a_pad = _round_up(A, ta)
    n_g = g_pad // tg
    n_a = a_pad // ta

    g = jnp.asarray(embed_g, compute_dtype)
    a = jnp.asarray(embed_a, compute_dtype)
    g = jnp.pad(g, ((0, g_pad - G), (0, Dp - D)))
    a = jnp.pad(a, ((0, a_pad - A), (0, Dp - D)))

    pos_b = jnp.asarray(pos).reshape(G, A).astype(bool)
    neg_b = jnp.asarray(neg).reshape(G, A).astype(bool)
    # Exact counts in the wrapper (int32 reduce fused with the mask prep);
    # removed from the kernel hot loop.
    cnt_pos = jnp.sum(pos_b).astype(jnp.float32)
    cnt_neg = jnp.sum(neg_b).astype(jnp.float32)
    # Bit-pack both masks into one int8 stream: bit0 = pos, bit1 = neg.
    flags = pos_b.astype(jnp.int8) | (neg_b.astype(jnp.int8) << 1)
    flags = jnp.pad(flags, ((0, g_pad - G), (0, a_pad - A)))

    kernel = functools.partial(_contrastive_cosine_kernel,
                               m=float(m), ew_dtype=ew_dtype)

    partials = pl.pallas_call(
        kernel,
        out_shape=jax.ShapeDtypeStruct((n_g, 16, 128), jnp.float32),
        grid_spec=pltpu.PrefetchScalarGridSpec(
            num_scalar_prefetch=0,
            grid=(n_g, n_a),
            in_specs=[
                pl.BlockSpec((tg, Dp), lambda i, j: (i, 0)),   # embed_g tile
                pl.BlockSpec((ta, Dp), lambda i, j: (j, 0)),   # embed_a tile
                pl.BlockSpec((tg, ta), lambda i, j: (i, j)),   # packed masks
            ],
            out_specs=pl.BlockSpec((1, 16, 128), lambda i, j: (i, 0, 0)),
        ),
        compiler_params=pltpu.CompilerParams(
            dimension_semantics=("parallel", "arbitrary"),
            vmem_limit_bytes=vmem_limit,
        ),
    )(g, a, flags)

    sum_pos = jnp.sum(partials[:, 0:8, :])
    sum_neg = jnp.sum(partials[:, 8:16, :])

    mean_pos = jnp.where(cnt_pos > 0.0, sum_pos / jnp.maximum(cnt_pos, 1.0), 0.0)
    mean_neg = jnp.where(cnt_neg > 0.0, sum_neg / jnp.maximum(cnt_neg, 1.0), 0.0)
    return mean_pos + mean_neg


def _reference(embed_g, embed_a, pos, neg, m=0.5):
    """Pure-JAX (f32) reference mirroring the PyTorch forward."""
    sim = (embed_g.astype(jnp.float32) @ embed_a.astype(jnp.float32).T).flatten()
    dist = jnp.sqrt(jnp.maximum(2.0 * (1.0 - sim), 0.0))
    pos = jnp.asarray(pos, bool).flatten()
    neg = jnp.asarray(neg, bool).flatten()
    cnt_p = jnp.sum(pos)
    cnt_n = jnp.sum(neg)
    mean_p = jnp.where(cnt_p > 0,
                       jnp.sum(jnp.where(pos, dist, 0.0)) / jnp.maximum(cnt_p, 1), 0.0)
    hinge = jnp.maximum(m - dist, 0.0)
    mean_n = jnp.where(cnt_n > 0,
                       jnp.sum(jnp.where(neg, hinge, 0.0)) / jnp.maximum(cnt_n, 1), 0.0)
    return mean_p + mean_n


def _run_case(key, G, A, D, m=0.5):
    kg, ka, kp = jax.random.split(key, 3)
    embed_g = jax.random.normal(kg, (G, D), dtype=jnp.float32)
    embed_a = jax.random.normal(ka, (A, D), dtype=jnp.float32)
    # Unit-normalize so sim is a true cosine similarity (typical usage).
    embed_g = embed_g / jnp.linalg.norm(embed_g, axis=-1, keepdims=True)
    embed_a = embed_a / jnp.linalg.norm(embed_a, axis=-1, keepdims=True)

    r = jax.random.uniform(kp, (G, A))
    pos = r < 0.25
    neg = r > 0.6

    loss = contrastive_cosine_loss(embed_g, embed_a, pos, neg, m=m)
    jax.block_until_ready(loss)
    ref = _reference(embed_g, embed_a, pos, neg, m=m)
    # bf16 MXU inputs (and bf16 sqrt on v6e/v7x) -> loose tolerance vs f32 ref.
    assert jnp.allclose(loss, ref, atol=2e-2, rtol=2e-2), (G, A, D, loss, ref)


if __name__ == "__main__":
    key = jax.random.PRNGKey(0)
    k1, k2 = jax.random.split(key)

    # Small demo shape consistent with the module's matmul (single-tile grid,
    # D padded up to 128).
    _run_case(k1, G=8, A=8, D=32)
    # Multi-tile 2x2 grid with padding in G, A and D: exercises the
    # parallel-G / reduce-A accumulation path and the mask bit-packing.
    _run_case(k2, G=320, A=1536, D=96)

    print("KERNEL_OK")
</pallas_src>

<mosaic_0001>
module attributes {stable_mosaic.version = 11 : i64} {
  func.func @_contrastive_cosine_kernel(%arg0: i32, %arg1: i32, %arg2: memref<32x128xbf16, #tpu.memory_space<vmem>>, %arg3: memref<128x128xbf16, #tpu.memory_space<vmem>>, %arg4: memref<32x128xi8, #tpu.memory_space<vmem>>, %arg5: memref<1x16x128xf32, #tpu.memory_space<vmem>>) attributes {dimension_semantics = [#tpu.dimension_semantics<parallel>, #tpu.dimension_semantics<arbitrary>], iteration_bounds = array<i64: 1, 1>, scalar_prefetch = 0 : i64, scratch_operands = 0 : i64, tpu.core_type = #tpu.core_type<tc>, window_params = [{transform_indices = @transform_0, window_bounds = array<i64: 32, 128>}, {transform_indices = @transform_1, window_bounds = array<i64: 128, 128>}, {transform_indices = @transform_2, window_bounds = array<i64: 32, 128>}, {transform_indices = @transform_3, window_bounds = array<i64: 1, 16, 128>}]} {
    %c0_i32 = arith.constant 0 : i32
    %0 = arith.cmpi eq, %arg1, %c0_i32 : i32
    %1 = arith.extui %0 : i1 to i32
    %c0_i32_0 = arith.constant 0 : i32
    %2 = arith.cmpi ne, %1, %c0_i32_0 : i32
    scf.if %2 {
      %cst_25 = arith.constant 0.000000e+00 : f32
      %56 = vector.broadcast %cst_25 : f32 to vector<1x16x128xf32>
      %c0_26 = arith.constant 0 : index
      %c0_27 = arith.constant 0 : index
      %c0_28 = arith.constant 0 : index
      %57 = vector.load %arg5[%c0_26, %c0_27, %c0_28] : memref<1x16x128xf32, #tpu.memory_space<vmem>>, vector<1x16x128xf32>
      tpu.vector_store %arg5[%c0_26, %c0_27, %c0_28], %56 {strides = array<i32>} : memref<1x16x128xf32, #tpu.memory_space<vmem>>, vector<1x16x128xf32>,
    } else {
    }
    %c0 = arith.constant 0 : index
    %c0_1 = arith.constant 0 : index
    %3 = vector.load %arg2[%c0, %c0_1] : memref<32x128xbf16, #tpu.memory_space<vmem>>, vector<32x128xbf16>
    %c0_2 = arith.constant 0 : index
    %c0_3 = arith.constant 0 : index
    %4 = vector.load %arg3[%c0_2, %c0_3] : memref<128x128xbf16, #tpu.memory_space<vmem>>, vector<128x128xbf16>
    %cst = arith.constant dense<0.000000e+00> : vector<32x128xf32>
    %5 = tpu.matmul %3, %4, %cst {dimension_numbers = #tpu.dot_dimension_numbers<[1], [1], [0], [0], [0, 0, 1, 0], [], []>} : vector<32x128xbf16>, vector<128x128xbf16>, vector<32x128xf32> -> vector<32x128xf32>
    %cst_4 = arith.constant 1.000000e+00 : f32
    %6 = vector.broadcast %cst_4 : f32 to vector<32x128xf32>
    %7 = arith.subf %6, %5 : vector<32x128xf32>
    %cst_5 = arith.constant 2.000000e+00 : f32
    %8 = vector.broadcast %cst_5 : f32 to vector<32x128xf32>
    %9 = arith.mulf %8, %7 : vector<32x128xf32>
    %cst_6 = arith.constant 0.000000e+00 : f32
    %10 = vector.broadcast %cst_6 : f32 to vector<32x128xf32>
    %11 = arith.maximumf %9, %10 : vector<32x128xf32>
    %12 = math.sqrt %11 : vector<32x128xf32>
    %c0_7 = arith.constant 0 : index
    %c0_8 = arith.constant 0 : index
    %13 = vector.load %arg4[%c0_7, %c0_8] : memref<32x128xi8, #tpu.memory_space<vmem>>, vector<32x128xi8>
    %c1_i8 = arith.constant 1 : i8
    %14 = vector.broadcast %c1_i8 : i8 to vector<32x128xi8>
    %15 = arith.andi %13, %14 : vector<32x128xi8>
    %c0_i8 = arith.constant 0 : i8
    %16 = vector.broadcast %c0_i8 : i8 to vector<32x128xi8>
    %17 = arith.cmpi ne, %15, %16 : vector<32x128xi8>
    %c2_i8 = arith.constant 2 : i8
    %18 = vector.broadcast %c2_i8 : i8 to vector<32x128xi8>
    %19 = arith.andi %13, %18 : vector<32x128xi8>
    %c0_i8_9 = arith.constant 0 : i8
    %20 = vector.broadcast %c0_i8_9 : i8 to vector<32x128xi8>
    %21 = arith.cmpi ne, %19, %20 : vector<32x128xi8>
    %cst_10 = arith.constant 0.000000e+00 : f32
    %22 = vector.broadcast %cst_10 : f32 to vector<32x128xf32>
    %23 = arith.select %17, %12, %22 : vector<32x128xi1>, vector<32x128xf32>
    %cst_11 = arith.constant 5.000000e-01 : f32
    %24 = vector.broadcast %cst_11 : f32 to vector<32x128xf32>
    %25 = arith.subf %24, %12 : vector<32x128xf32>
    %cst_12 = arith.constant 0.000000e+00 : f32
    %26 = vector.broadcast %cst_12 : f32 to vector<32x128xf32>
    %27 = arith.maximumf %25, %26 : vector<32x128xf32>
    %cst_13 = arith.constant 0.000000e+00 : f32
    %28 = vector.broadcast %cst_13 : f32 to vector<32x128xf32>
    %29 = arith.select %21, %27, %28 : vector<32x128xi1>, vector<32x128xf32>
    %c0_14 = arith.constant 0 : index
    %c0_15 = arith.constant 0 : index
    %c0_16 = arith.constant 0 : index
    %30 = vector.load %arg5[%c0_14, %c0_15, %c0_16] : memref<1x16x128xf32, #tpu.memory_space<vmem>>, vector<1x8x128xf32>
    %31 = vector.shape_cast %30 : vector<1x8x128xf32> to vector<8x128xf32>
    %32 = vector.extract_strided_slice %23 {offsets = [0, 0], sizes = [8, 128], strides = [1, 1]} : vector<32x128xf32> to vector<8x128xf32>
    %33 = vector.extract_strided_slice %23 {offsets = [8, 0], sizes = [8, 128], strides = [1, 1]} : vector<32x128xf32> to vector<8x128xf32>
    %34 = arith.addf %32, %33 : vector<8x128xf32>
    %35 = vector.extract_strided_slice %23 {offsets = [16, 0], sizes = [8, 128], strides = [1, 1]} : vector<32x128xf32> to vector<8x128xf32>
    %36 = arith.addf %34, %35 : vector<8x128xf32>
    %37 = vector.extract_strided_slice %23 {offsets = [24, 0], sizes = [8, 128], strides = [1, 1]} : vector<32x128xf32> to vector<8x128xf32>
    %38 = arith.addf %36, %37 : vector<8x128xf32>
    %39 = arith.addf %31, %38 : vector<8x128xf32>
    %c0_17 = arith.constant 0 : index
    %c0_18 = arith.constant 0 : index
    %c0_19 = arith.constant 0 : index
    %40 = vector.load %arg5[%c0_17, %c0_18, %c0_19] : memref<1x16x128xf32, #tpu.memory_space<vmem>>, vector<1x8x128xf32>
    %41 = vector.shape_cast %40 : vector<1x8x128xf32> to vector<8x128xf32>
    %42 = vector.shape_cast %39 : vector<8x128xf32> to vector<1x8x128xf32>
    tpu.vector_store %arg5[%c0_17, %c0_18, %c0_19], %42 {strides = array<i32>} : memref<1x16x128xf32, #tpu.memory_space<vmem>>, vector<1x8x128xf32>,
    %c0_20 = arith.constant 0 : index
    %c8 = arith.constant 8 : index
    %c0_21 = arith.constant 0 : index
    %43 = vector.load %arg5[%c0_20, %c8, %c0_21] : memref<1x16x128xf32, #tpu.memory_space<vmem>>, vector<1x8x128xf32>
    %44 = vector.shape_cast %43 : vector<1x8x128xf32> to vector<8x128xf32>
    %45 = vector.extract_strided_slice %29 {offsets = [0, 0], sizes = [8, 128], strides = [1, 1]} : vector<32x128xf32> to vector<8x128xf32>
    %46 = vector.extract_strided_slice %29 {offsets = [8, 0], sizes = [8, 128], strides = [1, 1]} : vector<32x128xf32> to vector<8x128xf32>
    %47 = arith.addf %45, %46 : vector<8x128xf32>
    %48 = vector.extract_strided_slice %29 {offsets = [16, 0], sizes = [8, 128], strides = [1, 1]} : vector<32x128xf32> to vector<8x128xf32>
    %49 = arith.addf %47, %48 : vector<8x128xf32>
    %50 = vector.extract_strided_slice %29 {offsets = [24, 0], sizes = [8, 128], strides = [1, 1]} : vector<32x128xf32> to vector<8x128xf32>
    %51 = arith.addf %49, %50 : vector<8x128xf32>
    %52 = arith.addf %44, %51 : vector<8x128xf32>
    %c0_22 = arith.constant 0 : index
    %c8_23 = arith.constant 8 : index
    %c0_24 = arith.constant 0 : index
    %53 = vector.load %arg5[%c0_22, %c8_23, %c0_24] : memref<1x16x128xf32, #tpu.memory_space<vmem>>, vector<1x8x128xf32>
    %54 = vector.shape_cast %53 : vector<1x8x128xf32> to vector<8x128xf32>
    %55 = vector.shape_cast %52 : vector<8x128xf32> to vector<1x8x128xf32>
    tpu.vector_store %arg5[%c0_22, %c8_23, %c0_24], %55 {strides = array<i32>} : memref<1x16x128xf32, #tpu.memory_space<vmem>>, vector<1x8x128xf32>,
    return
  }
  func.func @transform_0(%arg0: i32, %arg1: i32) -> (i32, i32) {
    %c0_i32 = arith.constant 0 : i32
    %c0_i32_0 = arith.constant 0 : i32
    return %arg0, %c0_i32 : i32, i32
  }
  func.func @transform_1(%arg0: i32, %arg1: i32) -> (i32, i32) {
    %c0_i32 = arith.constant 0 : i32
    %c0_i32_0 = arith.constant 0 : i32
    return %arg1, %c0_i32 : i32, i32
  }
  func.func @transform_2(%arg0: i32, %arg1: i32) -> (i32, i32) {
    %c0_i32 = arith.constant 0 : i32
    return %arg0, %arg1 : i32, i32
  }
  func.func @transform_3(%arg0: i32, %arg1: i32) -> (i32, i32, i32) {
    %c0_i32 = arith.constant 0 : i32
    %c0_i32_0 = arith.constant 0 : i32
    %c0_i32_1 = arith.constant 0 : i32
    return %arg0, %c0_i32, %c0_i32_0 : i32, i32, i32
  }
}

</mosaic_0001>

<llo_original>
// kernel: tpu_custom_call.1
$region0: #{tpu_custom_call.1}
  #allocation0 [shape = 'u32[]', space=smem, size = 0x4, offset = 0x4, fixed_abs, tag = 'smem constant byte address 0x4 - core index']
  #allocation1 [shape = 'u32[144,128]{1,0:T(1,128)}', space=vmem, size = 0x12000, scoped, tag = 'internal scratch']
  %s0 = inlined_call_operand.hbm [shape: bf16[32,128], index: 0, kind: input, shape index: {}]
  %s1 = inlined_call_operand.hbm [shape: bf16[128,128], index: 1, kind: input, shape index: {}]
  %s2 = inlined_call_operand.hbm [shape: s8[32,128], index: 2, kind: input, shape index: {}]
  %s3 = inlined_call_operand.hbm [shape: f32[1,16,128], index: 3, kind: output, shape index: {}]
  %s4 = sld [smem:[#allocation0]]
  $region38: #{tpu_custom_call.1} parent=0
    _
  %s6 = ssub.s32 1, %s4
  %s7 = scalar_select 0, %s6, %s4
  $region1: #{tpu_custom_call.1} parent=0
    #allocation2 [shape = 'u8[8192]{0}', space=vmem, size = 0x2000, scoped, tag = 'input window, operand 0, single buffered']
    #allocation3 [shape = 's32[1]{0}', space=sflag, size = 0x4, scoped, tag = 'scoped memory for tpu_custom_call.1']
    #allocation4 [shape = 's32[1]{0}', space=sflag, size = 0x4, scoped, tag = 'scoped memory for tpu_custom_call.1']
    #allocation5 [shape = 'u8[32768]{0}', space=vmem, size = 0x8000, scoped, tag = 'input window, operand 1, single buffered']
    #allocation6 [shape = 's32[1]{0}', space=sflag, size = 0x4, scoped, tag = 'scoped memory for tpu_custom_call.1']
    #allocation7 [shape = 'u8[4096]{0}', space=vmem, size = 0x1000, scoped, tag = 'input window, operand 2, single buffered']
    #allocation8 [shape = 'u8[8192]{0}', space=vmem, size = 0x2000, scoped, tag = 'output window, operand 0, single buffered']
    %8 = vsyncpa [#allocation3], 0
    %9 = vsyncpa [#allocation6], 0
    %10 = vsyncpa [#allocation4], 0
    // Predicated region
    $region2: #{tpu_custom_call.1} parent=1 // pred_check
      _
    $region3: #{tpu_custom_call.1} parent=1 // pred_check_branch
      %12 = sbr.rel (0) target = $region5
    $region4: #{tpu_custom_call.1} parent=1 // pred_region
      %s14 = ssub.s32 256, 256
      %15 = vsyncadd [#allocation3], %s14
      %s16 = sshll.u32 [#allocation2], 4
      %s17 = int_to_ptr.vmem [resolvable:$true] %s16
      %22 = dma.hbm_to_vmem [thread:$0]  %s0, 256, %s17, [#allocation3], 64, 64, 4
    $region5: #{tpu_custom_call.1} parent=1 // pred_fallthru
      _
    // Predicated region
    $region6: #{tpu_custom_call.1} parent=1 // pred_check
      _
    $region7: #{tpu_custom_call.1} parent=1 // pred_check_branch
      %24 = sbr.rel (0) target = $region9
    $region8: #{tpu_custom_call.1} parent=1 // pred_region
      %s26 = ssub.s32 1024, 1024
      %27 = vsyncadd [#allocation6], %s26
      %s28 = sshll.u32 [#allocation5], 4
      %s29 = int_to_ptr.vmem [resolvable:$true] %s28
      %34 = dma.hbm_to_vmem [thread:$0]  %s1, 1024, %s29, [#allocation6], 64, 64, 4
    $region9: #{tpu_custom_call.1} parent=1 // pred_fallthru
      _
    // Predicated region
    $region10: #{tpu_custom_call.1} parent=1 // pred_check
      _
    $region11: #{tpu_custom_call.1} parent=1 // pred_check_branch
      %36 = sbr.rel (0) target = $region13
    $region12: #{tpu_custom_call.1} parent=1 // pred_region
      %s38 = ssub.s32 128, 128
      %39 = vsyncadd [#allocation6], %s38
      %s41 = sshll.u32 [#allocation7], 4
      %s42 = int_to_ptr.vmem [resolvable:$true] %s41
      %44 = dma.hbm_to_vmem [thread:$0]  %s2, 128, %s42, [#allocation6]
    $region13: #{tpu_custom_call.1} parent=1 // pred_fallthru
      _
    // Predicated region
    $region14: #{tpu_custom_call.1} parent=1 // pred_check
      _
    $region15: #{tpu_custom_call.1} parent=1 // pred_check_branch
      %46 = sbr.rel (0) target = $region17
    $region16: #{tpu_custom_call.1} parent=1 // pred_region
      %47 = dma.done [#allocation3], 256
    $region17: #{tpu_custom_call.1} parent=1 // pred_fallthru
      _
    // Predicated region
    $region18: #{tpu_custom_call.1} parent=1 // pred_check
      _
    $region19: #{tpu_custom_call.1} parent=1 // pred_check_branch
      %49 = sbr.rel (0) target = $region21
    $region20: #{tpu_custom_call.1} parent=1 // pred_region
      %50 = dma.done [#allocation6], 1024
    $region21: #{tpu_custom_call.1} parent=1 // pred_fallthru
      _
    // Predicated region
    $region22: #{tpu_custom_call.1} parent=1 // pred_check
      _
    $region23: #{tpu_custom_call.1} parent=1 // pred_check_branch
      %52 = sbr.rel (0) target = $region25
    $region24: #{tpu_custom_call.1} parent=1 // pred_region
      %53 = dma.done [#allocation6], 128
    $region25: #{tpu_custom_call.1} parent=1 // pred_fallthru
      _
    %p58 = scmp.eq.s32.totalorder 0, 0
    // Predicated region
    $region26: #{tpu_custom_call.1} parent=1 // pred_check
      %p59 = pneg %p58
    $region27: #{tpu_custom_call.1} parent=1 // pred_check_branch
      %61 = sbr.rel (%p59) target = $region29
    $region28: #{tpu_custom_call.1} parent=1 // pred_region
      %62 = vst [vmem:[#allocation8] sm:$0xff] 0.0
      %63 = vst [vmem:[#allocation8 + $0x8] sm:$0xff] 0.0
    $region29: #{tpu_custom_call.1} parent=1 // pred_fallthru
      _
    %v64 = vld [vmem:[#allocation2] sm:$0xf]
    %v65 = vld [vmem:[#allocation2 + $0x4] sm:$0xf]
    %v66 = vld [vmem:[#allocation2 + $0x8] sm:$0xf]
    %v67 = vld [vmem:[#allocation2 + $0xc] sm:$0xf]
    %v68 = vld [vmem:[#allocation5] sm:$0xf]
    %v69 = vld [vmem:[#allocation5 + $0x4] sm:$0xf]
    %v70 = vld [vmem:[#allocation5 + $0x8] sm:$0xf]
    %v71 = vld [vmem:[#allocation5 + $0xc] sm:$0xf]
    %v72 = vld [vmem:[#allocation5 + $0x10] sm:$0xf]
    %v73 = vld [vmem:[#allocation5 + $0x14] sm:$0xf]
    %v74 = vld [vmem:[#allocation5 + $0x18] sm:$0xf]
    %v75 = vld [vmem:[#allocation5 + $0x1c] sm:$0xf]
    %v76 = vld [vmem:[#allocation5 + $0x20] sm:$0xf]
    %v77 = vld [vmem:[#allocation5 + $0x24] sm:$0xf]
    %v78 = vld [vmem:[#allocation5 + $0x28] sm:$0xf]
    %v79 = vld [vmem:[#allocation5 + $0x2c] sm:$0xf]
    %v80 = vld [vmem:[#allocation5 + $0x30] sm:$0xf]
    %v81 = vld [vmem:[#allocation5 + $0x34] sm:$0xf]
    %v82 = vld [vmem:[#allocation5 + $0x38] sm:$0xf]
    %v83 = vld [vmem:[#allocation5 + $0x3c] sm:$0xf]
    %v88 = vunpack.c.l.b16 %v64
    %v89 = vunpack.c.l.b16 %v65
    %v90 = vunpack.c.l.b16 %v66
    %v91 = vunpack.c.l.b16 %v67
    %v92 = vpack.c.b16 %v89, %v88
    %v93 = vpack.c.b16 %v91, %v90
    %v112 = vunpack.c.l.b16 %v68
    %v113 = vunpack.c.l.b16 %v69
    %v114 = vunpack.c.l.b16 %v70
    %v115 = vunpack.c.l.b16 %v71
    %v116 = vunpack.c.l.b16 %v72
    %v117 = vunpack.c.l.b16 %v73
    %v118 = vunpack.c.l.b16 %v74
    %v119 = vunpack.c.l.b16 %v75
    %v120 = vunpack.c.l.b16 %v76
    %v121 = vunpack.c.l.b16 %v77
    %v122 = vunpack.c.l.b16 %v78
    %v123 = vunpack.c.l.b16 %v79
    %v124 = vunpack.c.l.b16 %v80
    %v125 = vunpack.c.l.b16 %v81
    %v126 = vunpack.c.l.b16 %v82
    %v127 = vunpack.c.l.b16 %v83
    %v128 = vpack.c.b16 %v113, %v112
    %v129 = vpack.c.b16 %v115, %v114
    %v130 = vpack.c.b16 %v117, %v116
    %v131 = vpack.c.b16 %v119, %v118
    %v132 = vpack.c.b16 %v121, %v120
    %v133 = vpack.c.b16 %v123, %v122
    %v134 = vpack.c.b16 %v125, %v124
    %v135 = vpack.c.b16 %v127, %v126
    %144 = vmatprep.subr.bf16.mxu0 0
    %145 = vmatpush1.bf16.xpose.msra.mxu0 %v128
    %146 = vmatprep.subr.bf16.mxu0 0
    %147 = vmatpush1.bf16.xpose.msra.mxu0 %v129
    %148 = vmatprep.subr.bf16.mxu0 0
    %149 = vmatpush1.bf16.xpose.msra.mxu0 %v130
    %150 = vmatprep.subr.bf16.mxu0 0
    %151 = vmatpush1.bf16.xpose.msra.mxu0 %v131
    %152 = vmatprep.subr.bf16.mxu0 0
    %153 = vmatpush1.bf16.xpose.msra.mxu0 %v132
    %154 = vmatprep.subr.bf16.mxu0 0
    %155 = vmatpush1.bf16.xpose.msra.mxu0 %v133
    %156 = vmatprep.subr.bf16.mxu0 0
    %157 = vmatpush1.bf16.xpose.msra.mxu0 %v134
    %158 = vmatprep.subr.bf16.mxu0 0
    %159 = vmatpush1.bf16.xpose.msra.mxu0 %v135
    %160 = vmatprep.subr.bf16.mxu0 0
    %161 = vmatpush1.bf16.xpose.msra.mxu0 0
    %162 = vmatprep.subr.bf16.mxu0 0
    %163 = vmatpush1.bf16.xpose.msra.mxu0 0
    %164 = vmatprep.subr.bf16.mxu0 0
    %165 = vmatpush1.bf16.xpose.msra.mxu0 0
    %166 = vmatprep.subr.bf16.mxu0 0
    %167 = vmatpush1.bf16.xpose.msra.mxu0 0
    %168 = vmatprep.subr.bf16.mxu0 0
    %169 = vmatpush1.bf16.xpose.msra.mxu0 0
    %170 = vmatprep.subr.bf16.mxu0 0
    %171 = vmatpush1.bf16.xpose.msra.mxu0 0
    %172 = vmatprep.subr.bf16.mxu0 0
    %173 = vmatpush1.bf16.xpose.msra.mxu0 0
    %174 = vmatprep.subr.bf16.mxu0 0
    %175 = vmatpush1.bf16.xpose.msra.mxu0 0
    %176 = vmatprep.mubr.bf16.mxu0 0
    %177 = vmatmul.mubr.bf16.gmra.mrb[0].mxu0 %v92
    %v178 = vpop.f32.mrb[0].mxu0
    %v179 = vadd.f32 0.0, %v178
    %v180 = vpop.f32.mrb[0].mxu0
    %v181 = vpop.f32.mrb[0].mxu0
    %v182 = vadd.f32 0.0, %v181
    %v183 = vpop.f32.mrb[0].mxu0
    %184 = vmatprep.mubr.bf16.mxu0 0
    %185 = vmatmul.mubr.bf16.gmra.mrb[0].mxu0 %v93
    %v186 = vpop.f32.mrb[0].mxu0
    %v187 = vadd.f32 0.0, %v186
    %v188 = vpop.f32.mrb[0].mxu0
    %v189 = vpop.f32.mrb[0].mxu0
    %v190 = vadd.f32 0.0, %v189
    %v191 = vpop.f32.mrb[0].mxu0
    %192 = vdwg.mxu0
    %v193 = vsub.f32 1.0, %v179
    %v194 = vsub.f32 1.0, %v182
    %v195 = vsub.f32 1.0, %v187
    %v196 = vsub.f32 1.0, %v190
    %v197 = vmul.f32 %v193, 2.0
    %v198 = vmul.f32 %v194, 2.0
    %v199 = vmul.f32 %v195, 2.0
    %v200 = vmul.f32 %v196, 2.0
    %v201 = vmax.f32 %v197, 0.0
    %v202 = vmax.f32 %v198, 0.0
    %v203 = vmax.f32 %v199, 0.0
    %v204 = vmax.f32 %v200, 0.0
    %v205 = vrsqrt.pop %v201
    %v206 = vmul.f32 %v201, %v205
    %vm207 = vcmp.eq.f32.partialorder %v201, inf
    %v208 = vsel %vm207, %v201, %v206
    %vm209 = vcmp.eq.f32.partialorder %v201, 0.0
    %v210 = vand.u32 %v201, 2147483648
    %v211 = vsel %vm209, %v210, %v208
    %v212 = vrsqrt.pop %v202
    %v213 = vmul.f32 %v202, %v212
    %vm214 = vcmp.eq.f32.partialorder %v202, inf
    %v215 = vsel %vm214, %v202, %v213
    %vm216 = vcmp.eq.f32.partialorder %v202, 0.0
    %v217 = vand.u32 %v202, 2147483648
    %v218 = vsel %vm216, %v217, %v215
    %v219 = vrsqrt.pop %v203
    %v220 = vmul.f32 %v203, %v219
    %vm221 = vcmp.eq.f32.partialorder %v203, inf
    %v222 = vsel %vm221, %v203, %v220
    %vm223 = vcmp.eq.f32.partialorder %v203, 0.0
    %v224 = vand.u32 %v203, 2147483648
    %v225 = vsel %vm223, %v224, %v222
    %v226 = vrsqrt.pop %v204
    %v227 = vmul.f32 %v204, %v226
    %vm228 = vcmp.eq.f32.partialorder %v204, inf
    %v229 = vsel %vm228, %v204, %v227
    %vm230 = vcmp.eq.f32.partialorder %v204, 0.0
    %v231 = vand.u32 %v204, 2147483648
    %v232 = vsel %vm230, %v231, %v229
    %v233 = vld [vmem:[#allocation7] sm:$0xff]
    %v234 = vand.u32 %v233, 16843009
    %vm235 = vnez %v234
    %v236 = vand.u32 %v233, 33686018
    %vm237 = vnez %v236
    %v238 = vsel %vm235, 16843009, 0
    %v239 = vunpack.c.0.s8 %v238
    %v240 = vunpack.c.1.s8 %v238
    %v241 = vunpack.c.2.s8 %v238
    %v242 = vunpack.c.3.s8 %v238
    %v243 = vpack.c.b16 %v239, %v239
    %v244 = vpack.c.b8 %v243, %v243
    %v245 = vpack.c.b16 %v240, %v240
    %v246 = vpack.c.b8 %v245, %v245
    %v247 = vpack.c.b16 %v241, %v241
    %v248 = vpack.c.b8 %v247, %v247
    %v249 = vpack.c.b16 %v242, %v242
    %v250 = vpack.c.b8 %v249, %v249
    %vm251 = vnez %v244
    %vm252 = vnez %v246
    %vm253 = vnez %v248
    %vm254 = vnez %v250
    %v255 = vsel %vm251, 16843009, 0
    %v256 = vsel %vm252, 16843009, 0
    %v257 = vsel %vm253, 16843009, 0
    %v258 = vsel %vm254, 16843009, 0
    %v259 = vunpack.c.0.s8 %v255
    %v260 = vunpack.c.0.s8 %v256
    %v261 = vunpack.c.0.s8 %v257
    %v262 = vunpack.c.0.s8 %v258
    %vm263 = vcmp.ne.s32.totalorder %v259, 0
    %vm264 = vcmp.ne.s32.totalorder %v260, 0
    %vm265 = vcmp.ne.s32.totalorder %v261, 0
    %vm266 = vcmp.ne.s32.totalorder %v262, 0
    %v267 = vsel %vm263, %v211, 0.0
    %v268 = vsel %vm264, %v218, 0.0
    %v269 = vsel %vm265, %v225, 0.0
    %v270 = vsel %vm266, %v232, 0.0
    %v271 = vsub.f32 0.5, %v211
    %v272 = vsub.f32 0.5, %v218
    %v273 = vsub.f32 0.5, %v225
    %v274 = vsub.f32 0.5, %v232
    %v275 = vmax.f32 %v271, 0.0
    %v276 = vmax.f32 %v272, 0.0
    %v277 = vmax.f32 %v273, 0.0
    %v278 = vmax.f32 %v274, 0.0
    %v279 = vsel %vm237, 16843009, 0
    %v280 = vunpack.c.0.s8 %v279
    %v281 = vunpack.c.1.s8 %v279
    %v282 = vunpack.c.2.s8 %v279
    %v283 = vunpack.c.3.s8 %v279
    %v284 = vpack.c.b16 %v280, %v280
    %v285 = vpack.c.b8 %v284, %v284
    %v286 = vpack.c.b16 %v281, %v281
    %v287 = vpack.c.b8 %v286, %v286
    %v288 = vpack.c.b16 %v282, %v282
    %v289 = vpack.c.b8 %v288, %v288
    %v290 = vpack.c.b16 %v283, %v283
    %v291 = vpack.c.b8 %v290, %v290
    %vm292 = vnez %v285
    %vm293 = vnez %v287
    %vm294 = vnez %v289
    %vm295 = vnez %v291
    %v296 = vsel %vm292, 16843009, 0
    %v297 = vsel %vm293, 16843009, 0
    %v298 = vsel %vm294, 16843009, 0
    %v299 = vsel %vm295, 16843009, 0
    %v300 = vunpack.c.0.s8 %v296
    %v301 = vunpack.c.0.s8 %v297
    %v302 = vunpack.c.0.s8 %v298
    %v303 = vunpack.c.0.s8 %v299
    %vm304 = vcmp.ne.s32.totalorder %v300, 0
    %vm305 = vcmp.ne.s32.totalorder %v301, 0
    %vm306 = vcmp.ne.s32.totalorder %v302, 0
    %vm307 = vcmp.ne.s32.totalorder %v303, 0
    %v308 = vsel %vm304, %v275, 0.0
    %v309 = vsel %vm305, %v276, 0.0
    %v310 = vsel %vm306, %v277, 0.0
    %v311 = vsel %vm307, %v278, 0.0
    %v312 = vld [vmem:[#allocation8] sm:$0xff]
    %v313 = vadd.f32 %v267, %v268
    %v314 = vadd.f32 %v313, %v269
    %v315 = vadd.f32 %v314, %v270
    %v316 = vadd.f32 %v312, %v315
    %317 = vst [vmem:[#allocation8] sm:$0xff] %v316
    %v318 = vld [vmem:[#allocation8 + $0x8] sm:$0xff]
    %v319 = vadd.f32 %v308, %v309
    %v320 = vadd.f32 %v319, %v310
    %v321 = vadd.f32 %v320, %v311
    %v322 = vadd.f32 %v318, %v321
    %323 = vst [vmem:[#allocation8 + $0x8] sm:$0xff] %v322
    // Predicated region
    $region30: #{tpu_custom_call.1} parent=1 // pred_check
      _
    $region31: #{tpu_custom_call.1} parent=1 // pred_check_branch
      %325 = sbr.rel (0) target = $region33
    $region32: #{tpu_custom_call.1} parent=1 // pred_region
      %s327 = ssub.s32 256, 256
      %328 = vsyncadd [#allocation4], %s327
      %s329 = sshll.u32 [#allocation8], 4
      %s330 = int_to_ptr.vmem [resolvable:$true] %s329
      %335 = dma.vmem_to_hbm [thread:$0]  %s330, 256, %s3, [#allocation4], 128, 128, 8
    $region33: #{tpu_custom_call.1} parent=1 // pred_fallthru
      _
    // Predicated region
    $region34: #{tpu_custom_call.1} parent=1 // pred_check
      _
    $region35: #{tpu_custom_call.1} parent=1 // pred_check_branch
      %337 = sbr.rel (0) target = $region37
    $region36: #{tpu_custom_call.1} parent=1 // pred_region
      %338 = dma.done [#allocation4], 256
    $region37: #{tpu_custom_call.1} parent=1 // pred_fallthru
      _
    %339 = vsyncpa [#allocation3], 1
    %340 = vsyncpa [#allocation6], 1
    %341 = vsyncpa [#allocation4], 1

</llo_original>
